<compile_context>
chip_gen: v6e
topology: v6e:2x2x1
jax: 0.10.0
libtpu: 0.0.40
codegen_flags: <defaults>
</compile_context>

<pallas_src>
import jax
import jax.numpy as jnp
from jax import lax
from jax.experimental import pallas as pl
from jax.experimental.pallas import tpu as pltpu


def _round_up(a, b):
    return (a + b - 1) // b * b


# ---------------------------------------------------------------------------
# Kernels
# ---------------------------------------------------------------------------
def ff_kernel_single(x_ref, w1_ref, b1_ref, w2_ref, b2_ref, o_ref):
    """Single hidden step: both weight matrices resident in VMEM; no reduction
    machinery (no accumulator scratch, no pl.when init/finalize)."""
    x_bf = x_ref[...].astype(jnp.bfloat16)          # cast in-kernel; x stays f32 in HBM
    h = jnp.dot(x_bf, w1_ref[...], preferred_element_type=jnp.float32)
    h = h + b1_ref[...]                             # b1 tile [1, th] broadcasts over rows
    # Exact GELU (erf variant == torch.nn.GELU default), kept in f32.
    g = 0.5 * h * (1.0 + lax.erf(h * jnp.float32(0.7071067811865476)))
    # TODO(synk): dropout omitted (identity in eval mode); training-mode dropout
    # would use pltpu.prng_seed / pltpu.prng_random_bits.
    out = jnp.dot(g.astype(jnp.bfloat16), w2_ref[...],
                  preferred_element_type=jnp.float32) + b2_ref[...]
    o_ref[...] = out.astype(o_ref.dtype)


def ff_kernel_tiled(x_ref, w1_ref, b1_ref, w2_ref, b2_ref, o_ref, acc_ref):
    """Hidden axis tiled (grid axis 1, 'arbitrary'): the second matmul is
    accumulated into an f32 VMEM scratch and finalized on the last step."""
    k = pl.program_id(1)

    @pl.when(k == 0)
    def _():
        acc_ref[...] = jnp.zeros_like(acc_ref)

    x_bf = x_ref[...].astype(jnp.bfloat16)
    h = jnp.dot(x_bf, w1_ref[...], preferred_element_type=jnp.float32)
    h = h + b1_ref[...]
    g = 0.5 * h * (1.0 + lax.erf(h * jnp.float32(0.7071067811865476)))
    acc_ref[...] += jnp.dot(g.astype(jnp.bfloat16), w2_ref[...],
                            preferred_element_type=jnp.float32)

    @pl.when(k == pl.num_programs(1) - 1)
    def _():
        o_ref[...] = (acc_ref[...] + b2_ref[...]).astype(o_ref.dtype)


# ---------------------------------------------------------------------------
# Tiling / device heuristics
# ---------------------------------------------------------------------------
def _device_defaults():
    try:
        kind = jax.devices()[0].device_kind.lower()
    except Exception:
        kind = ""
    if "v6" in kind:
        # 1 TC, 128 MiB VMEM (32 MiB scoped default); weight-reuse target
        # ~650-715 flops/byte -> big row tile, raise scoped limit toward 100 MiB.
        return dict(tm=1024, vmem_budget=100 * 1024 * 1024, multi_tc=False)
    if "7" in kind:
        # v7x: 2 TCs/chip, only 64 MiB VMEM/TC -> cap well below physical.
        return dict(tm=512, vmem_budget=48 * 1024 * 1024, multi_tc=True)
    # v5e / other: ~240 flops/byte reuse target met at tm=256; the low 16 MiB
    # scoped-VMEM default is raised explicitly.
    return dict(tm=256, vmem_budget=64 * 1024 * 1024, multi_tc=False)


def _vmem_footprint(tm, th, dim, n_k, out_bytes):
    # Double-buffered input/output tiles + (tiled path) one f32 accumulator.
    vmem = 2 * tm * dim * 4            # x tile (f32, cast to bf16 in-kernel)
    vmem += 2 * dim * th * 2           # W1 tile (bf16)
    vmem += 2 * th * dim * 2           # W2 tile (bf16)
    vmem += 2 * th * 4 + 2 * dim * 4   # bias tiles (f32)
    vmem += 2 * tm * dim * out_bytes   # output tile
    if n_k > 1:
        vmem += tm * dim * 4           # accumulator scratch
    return vmem


def _choose_tiles(M, dim, H_pad, out_bytes, dd, tm_cap=None, th_cap=None):
    # Row tile: multiple of 16 (bf16 packing / MXU row fill), capped by M.
    tm = min(tm_cap if tm_cap is not None else dd["tm"], _round_up(M, 16))
    tm = max(16, _round_up(tm, 16))
    n_blocks = -(-M // tm)
    if dd["multi_tc"] and n_blocks == 1 and M > 16:
        n_blocks = 2                   # keep both v7x TensorCores busy
    tm = _round_up(-(-M // n_blocks), 16)

    # Hidden tile: largest multiple of 128 dividing H_pad that fits the budget
    # (prefers a single hidden step when the whole W1/W2 fit in VMEM).
    q = H_pad // 128
    cands = [128 * d for d in range(q, 0, -1) if q % d == 0]
    if th_cap is not None:
        cands = [c for c in cands if c <= th_cap] or [cands[-1]]
    th = cands[-1]
    for c in cands:
        if _vmem_footprint(tm, c, dim, H_pad // c, out_bytes) <= dd["vmem_budget"]:
            th = c
            break
    # Extreme dims: shrink the row tile if even th=128 overflows the budget.
    while (_vmem_footprint(tm, th, dim, H_pad // th, out_bytes) > dd["vmem_budget"]
           and tm > 16):
        tm = max(16, _round_up(tm // 2, 16))
    return tm, th


# ---------------------------------------------------------------------------
# Wrapper
# ---------------------------------------------------------------------------
def prepare_ff_params(w1, b1, w2, b2):
    """One-time weight prep (outside the per-call path): pad hidden to a
    multiple of 128 and cast to bf16, so no per-call HBM cast/pad passes run.
    w1: [dim, hidden], b1: [hidden], w2: [hidden, dim], b2: [dim]."""
    dim, hidden = w1.shape
    assert w2.shape == (hidden, dim)
    H_pad = _round_up(hidden, 128)
    if H_pad != hidden:
        w1 = jnp.pad(w1, ((0, 0), (0, H_pad - hidden)))
        b1 = jnp.pad(b1, (0, H_pad - hidden))
        w2 = jnp.pad(w2, ((0, H_pad - hidden), (0, 0)))
    return dict(
        w1=jnp.asarray(w1, jnp.bfloat16),
        b1=jnp.asarray(b1, jnp.float32).reshape(1, H_pad),
        w2=jnp.asarray(w2, jnp.bfloat16),
        b2=jnp.asarray(b2, jnp.float32).reshape(1, dim),
        dim=dim,
        hidden=hidden,
        hidden_pad=H_pad,
    )


def ff_forward(x, params, *, out_dtype=jnp.bfloat16, tm=None, th=None):
    """x: [..., dim]. Returns [..., dim] in out_dtype (bf16 by default)."""
    dim = params["dim"]
    H_pad = params["hidden_pad"]
    orig_shape = x.shape
    assert orig_shape[-1] == dim
    x2d = x.reshape(-1, dim).astype(jnp.float32)
    M = x2d.shape[0]

    dd = _device_defaults()
    out_bytes = jnp.dtype(out_dtype).itemsize
    tm_eff, th_eff = _choose_tiles(M, dim, H_pad, out_bytes, dd, tm_cap=tm, th_cap=th)

    M_pad = _round_up(M, tm_eff)
    if M_pad != M:
        x2d = jnp.pad(x2d, ((0, M_pad - M), (0, 0)))

    n_m = M_pad // tm_eff
    n_k = H_pad // th_eff

    if n_k == 1:
        grid = (n_m,)
        in_specs = [
            pl.BlockSpec((tm_eff, dim), lambda i: (i, 0)),     # x rows (f32)
            pl.BlockSpec((dim, H_pad), lambda i: (0, 0)),      # full W1 (bf16)
            pl.BlockSpec((1, H_pad), lambda i: (0, 0)),        # b1
            pl.BlockSpec((H_pad, dim), lambda i: (0, 0)),      # full W2 (bf16)
            pl.BlockSpec((1, dim), lambda i: (0, 0)),          # b2
        ]
        out_specs = pl.BlockSpec((tm_eff, dim), lambda i: (i, 0))
        scratch_shapes = []
        kernel = ff_kernel_single
        dims_sem = ("parallel",)
    else:
        grid = (n_m, n_k)
        in_specs = [
            pl.BlockSpec((tm_eff, dim), lambda i, k: (i, 0)),  # x rows (f32)
            pl.BlockSpec((dim, th_eff), lambda i, k: (0, k)),  # W1 tile
            pl.BlockSpec((1, th_eff), lambda i, k: (0, k)),    # b1 tile
            pl.BlockSpec((th_eff, dim), lambda i, k: (k, 0)),  # W2 tile
            pl.BlockSpec((1, dim), lambda i, k: (0, 0)),       # b2
        ]
        out_specs = pl.BlockSpec((tm_eff, dim), lambda i, k: (i, 0))
        scratch_shapes = [pltpu.VMEM((tm_eff, dim), jnp.float32)]
        kernel = ff_kernel_tiled
        dims_sem = ("parallel", "arbitrary")

    out = pl.pallas_call(
        kernel,
        out_shape=jax.ShapeDtypeStruct((M_pad, dim), out_dtype),
        grid_spec=pltpu.PrefetchScalarGridSpec(
            num_scalar_prefetch=0,
            grid=grid,
            in_specs=in_specs,
            out_specs=out_specs,
            scratch_shapes=scratch_shapes,
        ),
        compiler_params=pltpu.CompilerParams(
            dimension_semantics=dims_sem,
            vmem_limit_bytes=dd["vmem_budget"],
        ),
    )(x2d, params["w1"], params["b1"], params["w2"], params["b2"])

    return out[:M].reshape(orig_shape)


def ff_reference(x, w1, b1, w2, b2, out_dtype=jnp.bfloat16):
    """Pure-JAX reference emulating the kernel's bf16-in / f32-accumulate path."""
    xb = x.astype(jnp.float32).astype(jnp.bfloat16).astype(jnp.float32)
    w1b = w1.astype(jnp.bfloat16).astype(jnp.float32)
    w2b = w2.astype(jnp.bfloat16).astype(jnp.float32)
    h = xb @ w1b + b1
    g = 0.5 * h * (1.0 + lax.erf(h * jnp.float32(0.7071067811865476)))
    g = g.astype(jnp.bfloat16).astype(jnp.float32)
    return (g @ w2b + b2).astype(out_dtype)


if __name__ == "__main__":
    # Shapes consistent with the spec: x of shape (20, 256) with integer values
    # 1..19, dim=256, hidden_dim=512; dropout is identity in eval mode.
    M, dim, hidden = 20, 256, 512

    key = jax.random.PRNGKey(0)
    kx, k1, k2, k3, k4 = jax.random.split(key, 5)

    x = jax.random.randint(kx, (M, dim), 1, 20).astype(jnp.float32)

    # Deterministic params (PyTorch Linear init bounds), stored pre-transposed
    # to (in, out) so the kernel does plain row-major matmuls.
    bound1 = 1.0 / jnp.sqrt(dim)
    bound2 = 1.0 / jnp.sqrt(hidden)
    w1 = jax.random.uniform(k1, (dim, hidden), jnp.float32, -bound1, bound1)
    b1 = jax.random.uniform(k2, (hidden,), jnp.float32, -bound1, bound1)
    w2 = jax.random.uniform(k3, (hidden, dim), jnp.float32, -bound2, bound2)
    b2 = jax.random.uniform(k4, (dim,), jnp.float32, -bound2, bound2)

    params = prepare_ff_params(w1, b1, w2, b2)   # one-time bf16 cast / hidden pad
    ref = ff_reference(x, w1, b1, w2, b2).astype(jnp.float32)

    # Path 1: weights fully VMEM-resident (single hidden step, no accumulator).
    out1 = jax.block_until_ready(ff_forward(x, params))
    # Path 2: hidden-tiled reduction path (force a small hidden tile).
    out2 = jax.block_until_ready(ff_forward(x, params, th=128))

    for out in (out1, out2):
        assert out.shape == (M, dim)
        o = out.astype(jnp.float32)
        max_err = float(jnp.max(jnp.abs(o - ref)))
        assert jnp.allclose(o, ref, atol=5e-2, rtol=5e-2), (
            f"mismatch vs reference, max abs err {max_err}"
        )

    print("KERNEL_OK")
</pallas_src>

<mosaic_0001>
module attributes {stable_mosaic.version = 11 : i64} {
  func.func @ff_kernel_single(%arg0: i32, %arg1: memref<32x256xf32, #tpu.memory_space<vmem>>, %arg2: memref<256x512xbf16, #tpu.memory_space<vmem>>, %arg3: memref<1x512xf32, #tpu.memory_space<vmem>>, %arg4: memref<512x256xbf16, #tpu.memory_space<vmem>>, %arg5: memref<1x256xf32, #tpu.memory_space<vmem>>, %arg6: memref<32x256xbf16, #tpu.memory_space<vmem>>) attributes {dimension_semantics = [#tpu.dimension_semantics<parallel>], iteration_bounds = array<i64: 1>, scalar_prefetch = 0 : i64, scratch_operands = 0 : i64, tpu.core_type = #tpu.core_type<tc>, window_params = [{transform_indices = @transform_0, window_bounds = array<i64: 32, 256>}, {pipeline_mode = #tpu.pipeline_mode<synchronous>, transform_indices = @transform_1, window_bounds = array<i64: 256, 512>}, {pipeline_mode = #tpu.pipeline_mode<synchronous>, transform_indices = @transform_2, window_bounds = array<i64: 1, 512>}, {pipeline_mode = #tpu.pipeline_mode<synchronous>, transform_indices = @transform_3, window_bounds = array<i64: 512, 256>}, {pipeline_mode = #tpu.pipeline_mode<synchronous>, transform_indices = @transform_4, window_bounds = array<i64: 1, 256>}, {transform_indices = @transform_5, window_bounds = array<i64: 32, 256>}]} {
    %c0 = arith.constant 0 : index
    %c0_0 = arith.constant 0 : index
    %0 = vector.load %arg1[%c0, %c0_0] : memref<32x256xf32, #tpu.memory_space<vmem>>, vector<32x256xf32>
    %1 = arith.truncf %0 : vector<32x256xf32> to vector<32x256xbf16>
    %c0_1 = arith.constant 0 : index
    %c0_2 = arith.constant 0 : index
    %2 = vector.load %arg2[%c0_1, %c0_2] : memref<256x512xbf16, #tpu.memory_space<vmem>>, vector<256x512xbf16>
    %cst = arith.constant dense<0.000000e+00> : vector<32x512xf32>
    %3 = tpu.matmul %1, %2, %cst {dimension_numbers = #tpu.dot_dimension_numbers<[1], [0], [0], [1], [0, 0, 1, 1], [], []>} : vector<32x256xbf16>, vector<256x512xbf16>, vector<32x512xf32> -> vector<32x512xf32>
    %c0_3 = arith.constant 0 : index
    %c0_4 = arith.constant 0 : index
    %4 = vector.load %arg3[%c0_3, %c0_4] : memref<1x512xf32, #tpu.memory_space<vmem>>, vector<1x512xf32>
    %5 = vector.broadcast %4 : vector<1x512xf32> to vector<32x512xf32>
    %6 = arith.addf %3, %5 : vector<32x512xf32>
    %cst_5 = arith.constant 5.000000e-01 : f32
    %7 = vector.broadcast %cst_5 : f32 to vector<32x512xf32>
    %8 = arith.mulf %7, %6 : vector<32x512xf32>
    %cst_6 = arith.constant 0.707106769 : f32
    %9 = vector.broadcast %cst_6 : f32 to vector<32x512xf32>
    %10 = arith.mulf %6, %9 : vector<32x512xf32>
    %11 = math.erf %10 : vector<32x512xf32>
    %cst_7 = arith.constant 1.000000e+00 : f32
    %12 = vector.broadcast %cst_7 : f32 to vector<32x512xf32>
    %13 = arith.addf %12, %11 : vector<32x512xf32>
    %14 = arith.mulf %8, %13 : vector<32x512xf32>
    %15 = arith.truncf %14 : vector<32x512xf32> to vector<32x512xbf16>
    %c0_8 = arith.constant 0 : index
    %c0_9 = arith.constant 0 : index
    %16 = vector.load %arg4[%c0_8, %c0_9] : memref<512x256xbf16, #tpu.memory_space<vmem>>, vector<512x256xbf16>
    %cst_10 = arith.constant dense<0.000000e+00> : vector<32x256xf32>
    %17 = tpu.matmul %15, %16, %cst_10 {dimension_numbers = #tpu.dot_dimension_numbers<[1], [0], [0], [1], [0, 0, 1, 1], [], []>} : vector<32x512xbf16>, vector<512x256xbf16>, vector<32x256xf32> -> vector<32x256xf32>
    %c0_11 = arith.constant 0 : index
    %c0_12 = arith.constant 0 : index
    %18 = vector.load %arg5[%c0_11, %c0_12] : memref<1x256xf32, #tpu.memory_space<vmem>>, vector<1x256xf32>
    %19 = vector.broadcast %18 : vector<1x256xf32> to vector<32x256xf32>
    %20 = arith.addf %17, %19 : vector<32x256xf32>
    %21 = arith.truncf %20 : vector<32x256xf32> to vector<32x256xbf16>
    %c0_13 = arith.constant 0 : index
    %c0_14 = arith.constant 0 : index
    %22 = vector.load %arg6[%c0_13, %c0_14] : memref<32x256xbf16, #tpu.memory_space<vmem>>, vector<32x256xbf16>
    tpu.vector_store %arg6[%c0_13, %c0_14], %21 {strides = array<i32>} : memref<32x256xbf16, #tpu.memory_space<vmem>>, vector<32x256xbf16>,
    return
  }
  func.func @transform_0(%arg0: i32) -> (i32, i32) {
    %c0_i32 = arith.constant 0 : i32
    %c0_i32_0 = arith.constant 0 : i32
    return %arg0, %c0_i32 : i32, i32
  }
  func.func @transform_1(%arg0: i32) -> (i32, i32) {
    %c0_i32 = arith.constant 0 : i32
    %c0_i32_0 = arith.constant 0 : i32
    %c0_i32_1 = arith.constant 0 : i32
    return %c0_i32, %c0_i32_0 : i32, i32
  }
  func.func @transform_2(%arg0: i32) -> (i32, i32) {
    %c0_i32 = arith.constant 0 : i32
    %c0_i32_0 = arith.constant 0 : i32
    %c0_i32_1 = arith.constant 0 : i32
    return %c0_i32, %c0_i32_0 : i32, i32
  }
  func.func @transform_3(%arg0: i32) -> (i32, i32) {
    %c0_i32 = arith.constant 0 : i32
    %c0_i32_0 = arith.constant 0 : i32
    %c0_i32_1 = arith.constant 0 : i32
    return %c0_i32, %c0_i32_0 : i32, i32
  }
  func.func @transform_4(%arg0: i32) -> (i32, i32) {
    %c0_i32 = arith.constant 0 : i32
    %c0_i32_0 = arith.constant 0 : i32
    %c0_i32_1 = arith.constant 0 : i32
    return %c0_i32, %c0_i32_0 : i32, i32
  }
  func.func @transform_5(%arg0: i32) -> (i32, i32) {
    %c0_i32 = arith.constant 0 : i32
    %c0_i32_0 = arith.constant 0 : i32
    return %arg0, %c0_i32 : i32, i32
  }
}

</mosaic_0001>

<llo_original>
// kernel: tpu_custom_call.1
$region0: #{tpu_custom_call.1}
  #allocation0 [shape = 'u32[]', space=smem, size = 0x4, offset = 0x4, fixed_abs, tag = 'smem constant byte address 0x4 - core index']
  #allocation1 [shape = 'u32[144,128]{1,0:T(1,128)}', space=vmem, size = 0x12000, scoped, tag = 'internal scratch']
  %s0 = inlined_call_operand.hbm [shape: f32[32,256], index: 0, kind: input, shape index: {}]
  %s1 = inlined_call_operand.hbm [shape: bf16[256,512], index: 1, kind: input, shape index: {}]
  %s2 = inlined_call_operand.hbm [shape: f32[1,512], index: 2, kind: input, shape index: {}]
  %s3 = inlined_call_operand.hbm [shape: bf16[512,256], index: 3, kind: input, shape index: {}]
  %s4 = inlined_call_operand.vmem [shape: f32[1,256], index: 4, kind: input, shape index: {}]
  %s5 = inlined_call_operand.hbm [shape: bf16[32,256], index: 5, kind: output, shape index: {}]
  %s6 = sld [smem:[#allocation0]]
  $region46: #{tpu_custom_call.1} parent=0
    _
  %s8 = ssub.s32 1, %s6
  %s9 = scalar_select 0, %s8, %s6
  $region1: #{tpu_custom_call.1} parent=0
    #allocation2 [shape = 'u8[32768]{0}', space=vmem, size = 0x8000, scoped, tag = 'input window, operand 0, single buffered']
    #allocation3 [shape = 's32[1]{0}', space=sflag, size = 0x4, scoped, tag = 'scoped memory for tpu_custom_call.1']
    #allocation4 [shape = 's32[1]{0}', space=sflag, size = 0x4, scoped, tag = 'scoped memory for tpu_custom_call.1']
    #allocation5 [shape = 'u8[262144]{0}', space=vmem, size = 0x40000, scoped, tag = 'input window, operand 1, single buffered']
    #allocation6 [shape = 's32[1]{0}', space=sflag, size = 0x4, scoped, tag = 'scoped memory for tpu_custom_call.1']
    #allocation7 [shape = 'u8[2048]{0}', space=vmem, size = 0x800, scoped, tag = 'input window, operand 2, single buffered']
    #allocation8 [shape = 'u8[262144]{0}', space=vmem, size = 0x40000, scoped, tag = 'input window, operand 3, single buffered']
    #allocation9 [shape = 's32[1]{0}', space=sflag, size = 0x4, scoped, tag = 'scoped memory for tpu_custom_call.1']
    #allocation10 [shape = 'u8[16384]{0}', space=vmem, size = 0x4000, scoped, tag = 'output window, operand 0, single buffered']
    %10 = vsyncpa [#allocation3], 0
    %11 = vsyncpa [#allocation6], 0
    %12 = vsyncpa [#allocation9], 0
    %13 = vsyncpa [#allocation4], 0
    // Predicated region
    $region2: #{tpu_custom_call.1} parent=1 // pred_check
      _
    $region3: #{tpu_custom_call.1} parent=1 // pred_check_branch
      %15 = sbr.rel (0) target = $region5
    $region4: #{tpu_custom_call.1} parent=1 // pred_region
      %s17 = ssub.s32 1024, 1024
      %18 = vsyncadd [#allocation3], %s17
      %s19 = sshll.u32 [#allocation2], 4
      %s20 = int_to_ptr.vmem [resolvable:$true] %s19
      %25 = dma.hbm_to_vmem [thread:$0]  %s0, 1024, %s20, [#allocation3], 256, 256, 16
    $region5: #{tpu_custom_call.1} parent=1 // pred_fallthru
      _
    // Predicated region
    $region6: #{tpu_custom_call.1} parent=1 // pred_check
      _
    $region7: #{tpu_custom_call.1} parent=1 // pred_check_branch
      %27 = sbr.rel (0) target = $region9
    $region8: #{tpu_custom_call.1} parent=1 // pred_region
      %s29 = ssub.s32 8192, 8192
      %30 = vsyncadd [#allocation6], %s29
      %s31 = sshll.u32 [#allocation5], 4
      %s32 = int_to_ptr.vmem [resolvable:$true] %s31
      %37 = dma.hbm_to_vmem [thread:$0]  %s1, 8192, %s32, [#allocation6], 256, 256, 16
    $region9: #{tpu_custom_call.1} parent=1 // pred_fallthru
      _
    // Predicated region
    $region10: #{tpu_custom_call.1} parent=1 // pred_check
      _
    $region11: #{tpu_custom_call.1} parent=1 // pred_check_branch
      %39 = sbr.rel (0) target = $region13
    $region12: #{tpu_custom_call.1} parent=1 // pred_region
      %s41 = ssub.s32 64, 64
      %42 = vsyncadd [#allocation6], %s41
      %s44 = sshll.u32 [#allocation7], 4
      %s45 = int_to_ptr.vmem [resolvable:$true] %s44
      %47 = dma.hbm_to_vmem [thread:$0]  %s2, 64, %s45, [#allocation6]
    $region13: #{tpu_custom_call.1} parent=1 // pred_fallthru
      _
    // Predicated region
    $region14: #{tpu_custom_call.1} parent=1 // pred_check
      _
    $region15: #{tpu_custom_call.1} parent=1 // pred_check_branch
      %49 = sbr.rel (0) target = $region17
    $region16: #{tpu_custom_call.1} parent=1 // pred_region
      %s51 = ssub.s32 8192, 8192
      %52 = vsyncadd [#allocation9], %s51
      %s53 = sshll.u32 [#allocation8], 4
      %s54 = int_to_ptr.vmem [resolvable:$true] %s53
      %59 = dma.hbm_to_vmem [thread:$0]  %s3, 8192, %s54, [#allocation9], 128, 128, 8
    $region17: #{tpu_custom_call.1} parent=1 // pred_fallthru
      _
    // Predicated region
    $region18: #{tpu_custom_call.1} parent=1 // pred_check
      _
    $region19: #{tpu_custom_call.1} parent=1 // pred_check_branch
      %61 = sbr.rel (0) target = $region21
    $region20: #{tpu_custom_call.1} parent=1 // pred_region
      _
    $region21: #{tpu_custom_call.1} parent=1 // pred_fallthru
      _
    // Predicated region
    $region22: #{tpu_custom_call.1} parent=1 // pred_check
      _
    $region23: #{tpu_custom_call.1} parent=1 // pred_check_branch
      %63 = sbr.rel (0) target = $region25
    $region24: #{tpu_custom_call.1} parent=1 // pred_region
      %64 = dma.done [#allocation3], 1024
    $region25: #{tpu_custom_call.1} parent=1 // pred_fallthru
      _
    // Predicated region
    $region26: #{tpu_custom_call.1} parent=1 // pred_check
      _
    $region27: #{tpu_custom_call.1} parent=1 // pred_check_branch
      %66 = sbr.rel (0) target = $region29
    $region28: #{tpu_custom_call.1} parent=1 // pred_region
      %67 = dma.done [#allocation6], 8192
    $region29: #{tpu_custom_call.1} parent=1 // pred_fallthru
      _
    // Predicated region
    $region30: #{tpu_custom_call.1} parent=1 // pred_check
      _
    $region31: #{tpu_custom_call.1} parent=1 // pred_check_branch
      %69 = sbr.rel (0) target = $region33
    $region32: #{tpu_custom_call.1} parent=1 // pred_region
      %70 = dma.done [#allocation6], 64
    $region33: #{tpu_custom_call.1} parent=1 // pred_fallthru
      _
    // Predicated region
    $region34: #{tpu_custom_call.1} parent=1 // pred_check
      _
    $region35: #{tpu_custom_call.1} parent=1 // pred_check_branch
      %72 = sbr.rel (0) target = $region37
    $region36: #{tpu_custom_call.1} parent=1 // pred_region
      %73 = dma.done [#allocation9], 8192
    $region37: #{tpu_custom_call.1} parent=1 // pred_fallthru
      _
    %v74 = vld [vmem:[#allocation2] sm:$0xff]
    %v75 = vld [vmem:[#allocation2 + $0x8] sm:$0xff]
    %v76 = vld [vmem:[#allocation2 + $0x10] sm:$0xff]
    %v77 = vld [vmem:[#allocation2 + $0x18] sm:$0xff]
    %v78 = vld [vmem:[#allocation2 + $0x20] sm:$0xff]
    %v79 = vld [vmem:[#allocation2 + $0x28] sm:$0xff]
    %v80 = vld [vmem:[#allocation2 + $0x30] sm:$0xff]
    %v81 = vld [vmem:[#allocation2 + $0x38] sm:$0xff]
    %v82 = vpack.c.bf16 %v76, %v74
    %v83 = vpack.c.bf16 %v77, %v75
    %v84 = vpack.c.bf16 %v80, %v78
    %v85 = vpack.c.bf16 %v81, %v79
    %v86 = vld [vmem:[#allocation5] sm:$0xff]
    %v87 = vld [vmem:[#allocation5 + $0x8] sm:$0xff]
    %v88 = vld [vmem:[#allocation5 + $0x10] sm:$0xff]
    %v89 = vld [vmem:[#allocation5 + $0x18] sm:$0xff]
    %v90 = vld [vmem:[#allocation5 + $0x20] sm:$0xff]
    %v91 = vld [vmem:[#allocation5 + $0x28] sm:$0xff]
    %v92 = vld [vmem:[#allocation5 + $0x30] sm:$0xff]
    %v93 = vld [vmem:[#allocation5 + $0x38] sm:$0xff]
    %v94 = vld [vmem:[#allocation5 + $0x40] sm:$0xff]
    %v95 = vld [vmem:[#allocation5 + $0x48] sm:$0xff]
    %v96 = vld [vmem:[#allocation5 + $0x50] sm:$0xff]
    %v97 = vld [vmem:[#allocation5 + $0x58] sm:$0xff]
    %v98 = vld [vmem:[#allocation5 + $0x60] sm:$0xff]
    %v99 = vld [vmem:[#allocation5 + $0x68] sm:$0xff]
    %v100 = vld [vmem:[#allocation5 + $0x70] sm:$0xff]
    %v101 = vld [vmem:[#allocation5 + $0x78] sm:$0xff]
    %v102 = vld [vmem:[#allocation5 + $0x80] sm:$0xff]
    %v103 = vld [vmem:[#allocation5 + $0x88] sm:$0xff]
    %v104 = vld [vmem:[#allocation5 + $0x90] sm:$0xff]
    %v105 = vld [vmem:[#allocation5 + $0x98] sm:$0xff]
    %v106 = vld [vmem:[#allocation5 + $0xa0] sm:$0xff]
    %v107 = vld [vmem:[#allocation5 + $0xa8] sm:$0xff]
    %v108 = vld [vmem:[#allocation5 + $0xb0] sm:$0xff]
    %v109 = vld [vmem:[#allocation5 + $0xb8] sm:$0xff]
    %v110 = vld [vmem:[#allocation5 + $0xc0] sm:$0xff]
    %v111 = vld [vmem:[#allocation5 + $0xc8] sm:$0xff]
    %v112 = vld [vmem:[#allocation5 + $0xd0] sm:$0xff]
    %v113 = vld [vmem:[#allocation5 + $0xd8] sm:$0xff]
    %v114 = vld [vmem:[#allocation5 + $0xe0] sm:$0xff]
    %v115 = vld [vmem:[#allocation5 + $0xe8] sm:$0xff]
    %v116 = vld [vmem:[#allocation5 + $0xf0] sm:$0xff]
    %v117 = vld [vmem:[#allocation5 + $0xf8] sm:$0xff]
    %v118 = vld [vmem:[#allocation5 + $0x100] sm:$0xff]
    %v119 = vld [vmem:[#allocation5 + $0x108] sm:$0xff]
    %v120 = vld [vmem:[#allocation5 + $0x110] sm:$0xff]
    %v121 = vld [vmem:[#allocation5 + $0x118] sm:$0xff]
    %v122 = vld [vmem:[#allocation5 + $0x120] sm:$0xff]
    %v123 = vld [vmem:[#allocation5 + $0x128] sm:$0xff]
    %v124 = vld [vmem:[#allocation5 + $0x130] sm:$0xff]
    %v125 = vld [vmem:[#allocation5 + $0x138] sm:$0xff]
    %v126 = vld [vmem:[#allocation5 + $0x140] sm:$0xff]
    %v127 = vld [vmem:[#allocation5 + $0x148] sm:$0xff]
    %v128 = vld [vmem:[#allocation5 + $0x150] sm:$0xff]
    %v129 = vld [vmem:[#allocation5 + $0x158] sm:$0xff]
    %v130 = vld [vmem:[#allocation5 + $0x160] sm:$0xff]
    %v131 = vld [vmem:[#allocation5 + $0x168] sm:$0xff]
    %v132 = vld [vmem:[#allocation5 + $0x170] sm:$0xff]
    %v133 = vld [vmem:[#allocation5 + $0x178] sm:$0xff]
    %v134 = vld [vmem:[#allocation5 + $0x180] sm:$0xff]
    %v135 = vld [vmem:[#allocation5 + $0x188] sm:$0xff]
    %v136 = vld [vmem:[#allocation5 + $0x190] sm:$0xff]
    %v137 = vld [vmem:[#allocation5 + $0x198] sm:$0xff]
    %v138 = vld [vmem:[#allocation5 + $0x1a0] sm:$0xff]
    %v139 = vld [vmem:[#allocation5 + $0x1a8] sm:$0xff]
    %v140 = vld [vmem:[#allocation5 + $0x1b0] sm:$0xff]
    %v141 = vld [vmem:[#allocation5 + $0x1b8] sm:$0xff]
    %v142 = vld [vmem:[#allocation5 + $0x1c0] sm:$0xff]
    %v143 = vld [vmem:[#allocation5 + $0x1c8] sm:$0xff]
    %v144 = vld [vmem:[#allocation5 + $0x1d0] sm:$0xff]
    %v145 = vld [vmem:[#allocation5 + $0x1d8] sm:$0xff]
    %v146 = vld [vmem:[#allocation5 + $0x1e0] sm:$0xff]
    %v147 = vld [vmem:[#allocation5 + $0x1e8] sm:$0xff]
    %v148 = vld [vmem:[#allocation5 + $0x1f0] sm:$0xff]
    %v149 = vld [vmem:[#allocation5 + $0x1f8] sm:$0xff]
    %v150 = vld [vmem:[#allocation7] sm:$0xf]
    %v152 = vlaneseq
    %v153 = vshrl.u32 %v152, 7
    %v154 = vsub.s32 0, %v153
    %v155 = vrot.slane %v150, %v154
    %v156 = vlaneseq
    %v157 = vshrl.u32 %v156, 7
    %v158 = vsub.s32 1, %v157
    %v159 = vrot.slane %v150, %v158
    %v160 = vlaneseq
    %v161 = vshrl.u32 %v160, 7
    %v162 = vsub.s32 2, %v161
    %v163 = vrot.slane %v150, %v162
    %v164 = vlaneseq
    %v165 = vshrl.u32 %v164, 7
    %v166 = vsub.s32 3, %v165
    %v167 = vrot.slane %v150, %v166
    %v236 = vunpack.c.l.b16 %v86
    %v237 = vunpack.c.h.b16 %v86
    %v238 = vunpack.c.l.b16 %v87
    %v239 = vunpack.c.h.b16 %v87
    %v240 = vunpack.c.l.b16 %v88
    %v241 = vunpack.c.h.b16 %v88
    %v242 = vunpack.c.l.b16 %v89
    %v243 = vunpack.c.h.b16 %v89
    %v244 = vunpack.c.l.b16 %v90
    %v245 = vunpack.c.h.b16 %v90
    %v246 = vunpack.c.l.b16 %v91
    %v247 = vunpack.c.h.b16 %v91
    %v248 = vunpack.c.l.b16 %v92
    %v249 = vunpack.c.h.b16 %v92
    %v250 = vunpack.c.l.b16 %v93
    %v251 = vunpack.c.h.b16 %v93
    %v252 = vunpack.c.l.b16 %v94
    %v253 = vunpack.c.h.b16 %v94
    %v254 = vunpack.c.l.b16 %v95
    %v255 = vunpack.c.h.b16 %v95
    %v256 = vunpack.c.l.b16 %v96
    %v257 = vunpack.c.h.b16 %v96
    %v258 = vunpack.c.l.b16 %v97
    %v259 = vunpack.c.h.b16 %v97
    %v260 = vunpack.c.l.b16 %v98
    %v261 = vunpack.c.h.b16 %v98
    %v262 = vunpack.c.l.b16 %v99
    %v263 = vunpack.c.h.b16 %v99
    %v264 = vunpack.c.l.b16 %v100
    %v265 = vunpack.c.h.b16 %v100
    %v266 = vunpack.c.l.b16 %v101
    %v267 = vunpack.c.h.b16 %v101
    %v268 = vunpack.c.l.b16 %v102
    %v269 = vunpack.c.h.b16 %v102
    %v270 = vunpack.c.l.b16 %v103
    %v271 = vunpack.c.h.b16 %v103
    %v272 = vunpack.c.l.b16 %v104
    %v273 = vunpack.c.h.b16 %v104
    %v274 = vunpack.c.l.b16 %v105
    %v275 = vunpack.c.h.b16 %v105
    %v276 = vunpack.c.l.b16 %v106
    %v277 = vunpack.c.h.b16 %v106
    %v278 = vunpack.c.l.b16 %v107
    %v279 = vunpack.c.h.b16 %v107
    %v280 = vunpack.c.l.b16 %v108
    %v281 = vunpack.c.h.b16 %v108
    %v282 = vunpack.c.l.b16 %v109
    %v283 = vunpack.c.h.b16 %v109
    %v284 = vunpack.c.l.b16 %v110
    %v285 = vunpack.c.h.b16 %v110
    %v286 = vunpack.c.l.b16 %v111
    %v287 = vunpack.c.h.b16 %v111
    %v288 = vunpack.c.l.b16 %v112
    %v289 = vunpack.c.h.b16 %v112
    %v290 = vunpack.c.l.b16 %v113
    %v291 = vunpack.c.h.b16 %v113
    %v292 = vunpack.c.l.b16 %v114
    %v293 = vunpack.c.h.b16 %v114
    %v294 = vunpack.c.l.b16 %v115
    %v295 = vunpack.c.h.b16 %v115
    %v296 = vunpack.c.l.b16 %v116
    %v297 = vunpack.c.h.b16 %v116
    %v298 = vunpack.c.l.b16 %v117
    %v299 = vunpack.c.h.b16 %v117
    %v300 = vunpack.c.l.b16 %v118
    %v301 = vunpack.c.h.b16 %v118
    %v302 = vunpack.c.l.b16 %v119
    %v303 = vunpack.c.h.b16 %v119
    %v304 = vunpack.c.l.b16 %v120
    %v305 = vunpack.c.h.b16 %v120
    %v306 = vunpack.c.l.b16 %v121
    %v307 = vunpack.c.h.b16 %v121
    %v308 = vunpack.c.l.b16 %v122
    %v309 = vunpack.c.h.b16 %v122
    %v310 = vunpack.c.l.b16 %v123
    %v311 = vunpack.c.h.b16 %v123
    %v312 = vunpack.c.l.b16 %v124
    %v313 = vunpack.c.h.b16 %v124
    %v314 = vunpack.c.l.b16 %v125
    %v315 = vunpack.c.h.b16 %v125
    %v316 = vunpack.c.l.b16 %v126
    %v317 = vunpack.c.h.b16 %v126
    %v318 = vunpack.c.l.b16 %v127
    %v319 = vunpack.c.h.b16 %v127
    %v320 = vunpack.c.l.b16 %v128
    %v321 = vunpack.c.h.b16 %v128
    %v322 = vunpack.c.l.b16 %v129
    %v323 = vunpack.c.h.b16 %v129
    %v324 = vunpack.c.l.b16 %v130
    %v325 = vunpack.c.h.b16 %v130
    %v326 = vunpack.c.l.b16 %v131
    %v327 = vunpack.c.h.b16 %v131
    %v328 = vunpack.c.l.b16 %v132
    %v329 = vunpack.c.h.b16 %v132
    %v330 = vunpack.c.l.b16 %v133
    %v331 = vunpack.c.h.b16 %v133
    %v332 = vunpack.c.l.b16 %v134
    %v333 = vunpack.c.h.b16 %v134
    %v334 = vunpack.c.l.b16 %v135
    %v335 = vunpack.c.h.b16 %v135
    %v336 = vunpack.c.l.b16 %v136
    %v337 = vunpack.c.h.b16 %v136
    %v338 = vunpack.c.l.b16 %v137
    %v339 = vunpack.c.h.b16 %v137
    %v340 = vunpack.c.l.b16 %v138
    %v341 = vunpack.c.h.b16 %v138
    %v342 = vunpack.c.l.b16 %v139
    %v343 = vunpack.c.h.b16 %v139
    %v344 = vunpack.c.l.b16 %v140
    %v345 = vunpack.c.h.b16 %v140
    %v346 = vunpack.c.l.b16 %v141
    %v347 = vunpack.c.h.b16 %v141
    %v348 = vunpack.c.l.b16 %v142
    %v349 = vunpack.c.h.b16 %v142
    %v350 = vunpack.c.l.b16 %v143
    %v351 = vunpack.c.h.b16 %v143
    %v352 = vunpack.c.l.b16 %v144
    %v353 = vunpack.c.h.b16 %v144
    %v354 = vunpack.c.l.b16 %v145
    %v355 = vunpack.c.h.b16 %v145
    %v356 = vunpack.c.l.b16 %v146
    %v357 = vunpack.c.h.b16 %v146
    %v358 = vunpack.c.l.b16 %v147
    %v359 = vunpack.c.h.b16 %v147
    %v360 = vunpack.c.l.b16 %v148
    %v361 = vunpack.c.h.b16 %v148
    %v362 = vunpack.c.l.b16 %v149
    %v363 = vunpack.c.h.b16 %v149
    %v364 = vpack.c.b16 %v240, %v236
    %v365 = vpack.c.b16 %v241, %v237
    %v366 = vpack.c.b16 %v242, %v238
    %v367 = vpack.c.b16 %v243, %v239
    %v368 = vpack.c.b16 %v248, %v244
    %v369 = vpack.c.b16 %v249, %v245
    %v370 = vpack.c.b16 %v250, %v246
    %v371 = vpack.c.b16 %v251, %v247
    %v372 = vpack.c.b16 %v256, %v252
    %v373 = vpack.c.b16 %v257, %v253
    %v374 = vpack.c.b16 %v258, %v254
    %v375 = vpack.c.b16 %v259, %v255
    %v376 = vpack.c.b16 %v264, %v260
    %v377 = vpack.c.b16 %v265, %v261
    %v378 = vpack.c.b16 %v266, %v262
    %v379 = vpack.c.b16 %v267, %v263
    %v380 = vpack.c.b16 %v272, %v268
    %v381 = vpack.c.b16 %v273, %v269
    %v382 = vpack.c.b16 %v274, %v270
    %v383 = vpack.c.b16 %v275, %v271
    %v384 = vpack.c.b16 %v280, %v276
    %v385 = vpack.c.b16 %v281, %v277
    %v386 = vpack.c.b16 %v282, %v278
    %v387 = vpack.c.b16 %v283, %v279
    %v388 = vpack.c.b16 %v288, %v284
    %v389 = vpack.c.b16 %v289, %v285
    %v390 = vpack.c.b16 %v290, %v286
    %v391 = vpack.c.b16 %v291, %v287
    %v392 = vpack.c.b16 %v296, %v292
    %v393 = vpack.c.b16 %v297, %v293
    %v394 = vpack.c.b16 %v298, %v294
    %v395 = vpack.c.b16 %v299, %v295
    %v396 = vpack.c.b16 %v304, %v300
    %v397 = vpack.c.b16 %v305, %v301
    %v398 = vpack.c.b16 %v306, %v302
    %v399 = vpack.c.b16 %v307, %v303
    %v400 = vpack.c.b16 %v312, %v308
    %v401 = vpack.c.b16 %v313, %v309
    %v402 = vpack.c.b16 %v314, %v310
    %v403 = vpack.c.b16 %v315, %v311
    %v404 = vpack.c.b16 %v320, %v316
    %v405 = vpack.c.b16 %v321, %v317
    %v406 = vpack.c.b16 %v322, %v318
    %v407 = vpack.c.b16 %v323, %v319
    %v408 = vpack.c.b16 %v328, %v324
    %v409 = vpack.c.b16 %v329, %v325
    %v410 = vpack.c.b16 %v330, %v326
    %v411 = vpack.c.b16 %v331, %v327
    %v412 = vpack.c.b16 %v336, %v332
    %v413 = vpack.c.b16 %v337, %v333
    %v414 = vpack.c.b16 %v338, %v334
    %v415 = vpack.c.b16 %v339, %v335
    %v416 = vpack.c.b16 %v344, %v340
    %v417 = vpack.c.b16 %v345, %v341
    %v418 = vpack.c.b16 %v346, %v342
    %v419 = vpack.c.b16 %v347, %v343
    %v420 = vpack.c.b16 %v352, %v348
    %v421 = vpack.c.b16 %v353, %v349
    %v422 = vpack.c.b16 %v354, %v350
    %v423 = vpack.c.b16 %v355, %v351
    %v424 = vpack.c.b16 %v360, %v356
    %v425 = vpack.c.b16 %v361, %v357
    %v426 = vpack.c.b16 %v362, %v358
    %v427 = vpack.c.b16 %v363, %v359
    %492 = vmatprep.subr.bf16.mxu0 %v393
    %493 = vmatpush1.bf16.msra.mxu0 %v392
    %494 = vmatprep.subr.bf16.mxu0 %v389
    %495 = vmatpush1.bf16.msra.mxu0 %v388
    %496 = vmatprep.subr.bf16.mxu0 %v385
    %497 = vmatpush1.bf16.msra.mxu0 %v384
    %498 = vmatprep.subr.bf16.mxu0 %v381
    %499 = vmatpush1.bf16.msra.mxu0 %v380
    %500 = vmatprep.subr.bf16.mxu0 %v377
    %501 = vmatpush1.bf16.msra.mxu0 %v376
    %502 = vmatprep.subr.bf16.mxu0 %v373
    %503 = vmatpush1.bf16.msra.mxu0 %v372
    %504 = vmatprep.subr.bf16.mxu0 %v369
    %505 = vmatpush1.bf16.msra.mxu0 %v368
    %506 = vmatprep.subr.bf16.mxu0 %v365
    %507 = vmatpush1.bf16.msra.mxu0 %v364
    %508 = vmatprep.subr.bf16.mxu0 %v425
    %509 = vmatpush2.bf16.msra.mxu0 %v424
    %510 = vmatprep.subr.bf16.mxu0 %v421
    %511 = vmatpush2.bf16.msra.mxu0 %v420
    %512 = vmatprep.subr.bf16.mxu0 %v417
    %513 = vmatpush2.bf16.msra.mxu0 %v416
    %514 = vmatprep.subr.bf16.mxu0 %v413
    %515 = vmatpush2.bf16.msra.mxu0 %v412
    %516 = vmatprep.subr.bf16.mxu0 %v409
    %517 = vmatpush2.bf16.msra.mxu0 %v408
    %518 = vmatprep.subr.bf16.mxu0 %v405
    %519 = vmatpush2.bf16.msra.mxu0 %v404
    %520 = vmatprep.subr.bf16.mxu0 %v401
    %521 = vmatpush2.bf16.msra.mxu0 %v400
    %522 = vmatprep.subr.bf16.mxu0 %v397
    %523 = vmatpush2.bf16.msra.mxu0 %v396
    %524 = vmatprep.mubr.bf16.mxu0 %v83
    %525 = vmatmul.mubr.bf16.gmra.mxu0 %v82
    %v526 = vpop.f32.mrf.mxu0
    %v527 = vadd.f32 %v155, %v526
    %v528 = vpop.f32.mrf.mxu0
    %v529 = vadd.f32 %v159, %v528
    %v530 = vpop.f32.mrf.mxu0
    %v531 = vadd.f32 %v155, %v530
    %v532 = vpop.f32.mrf.mxu0
    %v533 = vadd.f32 %v159, %v532
    %534 = vmatprep.mubr.bf16.mxu0 %v85
    %535 = vmatmul.mubr.bf16.gmra.mxu0 %v84
    %v536 = vpop.f32.mrf.mxu0
    %v537 = vadd.f32 %v155, %v536
    %v538 = vpop.f32.mrf.mxu0
    %v539 = vadd.f32 %v159, %v538
    %v540 = vpop.f32.mrf.mxu0
    %v541 = vadd.f32 %v155, %v540
    %v542 = vpop.f32.mrf.mxu0
    %v543 = vadd.f32 %v159, %v542
    %544 = vdwg.mxu0
    %545 = vmatprep.subr.bf16.mxu0 %v395
    %546 = vmatpush1.bf16.msra.mxu0 %v394
    %547 = vmatprep.subr.bf16.mxu0 %v391
    %548 = vmatpush1.bf16.msra.mxu0 %v390
    %549 = vmatprep.subr.bf16.mxu0 %v387
    %550 = vmatpush1.bf16.msra.mxu0 %v386
    %551 = vmatprep.subr.bf16.mxu0 %v383
    %552 = vmatpush1.bf16.msra.mxu0 %v382
    %553 = vmatprep.subr.bf16.mxu0 %v379
    %554 = vmatpush1.bf16.msra.mxu0 %v378
    %555 = vmatprep.subr.bf16.mxu0 %v375
    %556 = vmatpush1.bf16.msra.mxu0 %v374
    %557 = vmatprep.subr.bf16.mxu0 %v371
    %558 = vmatpush1.bf16.msra.mxu0 %v370
    %559 = vmatprep.subr.bf16.mxu0 %v367
    %560 = vmatpush1.bf16.msra.mxu0 %v366
    %561 = vmatprep.subr.bf16.mxu0 %v427
    %562 = vmatpush2.bf16.msra.mxu0 %v426
    %563 = vmatprep.subr.bf16.mxu0 %v423
    %564 = vmatpush2.bf16.msra.mxu0 %v422
    %565 = vmatprep.subr.bf16.mxu0 %v419
    %566 = vmatpush2.bf16.msra.mxu0 %v418
    %567 = vmatprep.subr.bf16.mxu0 %v415
    %568 = vmatpush2.bf16.msra.mxu0 %v414
    %569 = vmatprep.subr.bf16.mxu0 %v411
    %570 = vmatpush2.bf16.msra.mxu0 %v410
    %571 = vmatprep.subr.bf16.mxu0 %v407
    %572 = vmatpush2.bf16.msra.mxu0 %v406
    %573 = vmatprep.subr.bf16.mxu0 %v403
    %574 = vmatpush2.bf16.msra.mxu0 %v402
    %575 = vmatprep.subr.bf16.mxu0 %v399
    %576 = vmatpush2.bf16.msra.mxu0 %v398
    %577 = vmatprep.mubr.bf16.mxu0 %v83
    %578 = vmatmul.mubr.bf16.gmra.mxu0 %v82
    %v579 = vpop.f32.mrf.mxu0
    %v580 = vadd.f32 %v163, %v579
    %v581 = vpop.f32.mrf.mxu0
    %v582 = vadd.f32 %v167, %v581
    %v583 = vpop.f32.mrf.mxu0
    %v584 = vadd.f32 %v163, %v583
    %v585 = vpop.f32.mrf.mxu0
    %v586 = vadd.f32 %v167, %v585
    %587 = vmatprep.mubr.bf16.mxu0 %v85
    %588 = vmatmul.mubr.bf16.gmra.mxu0 %v84
    %v589 = vpop.f32.mrf.mxu0
    %v590 = vadd.f32 %v163, %v589
    %v591 = vpop.f32.mrf.mxu0
    %v592 = vadd.f32 %v167, %v591
    %v593 = vpop.f32.mrf.mxu0
    %v594 = vadd.f32 %v163, %v593
    %v595 = vpop.f32.mrf.mxu0
    %v596 = vadd.f32 %v167, %v595
    %597 = vdwg.mxu0
    %v598 = vmul.f32 %v527, 0.5
    %v599 = vmul.f32 %v529, 0.5
    %v600 = vmul.f32 %v580, 0.5
    %v601 = vmul.f32 %v582, 0.5
    %v602 = vmul.f32 %v531, 0.5
    %v603 = vmul.f32 %v533, 0.5
    %v604 = vmul.f32 %v584, 0.5
    %v605 = vmul.f32 %v586, 0.5
    %v606 = vmul.f32 %v537, 0.5
    %v607 = vmul.f32 %v539, 0.5
    %v608 = vmul.f32 %v590, 0.5
    %v609 = vmul.f32 %v592, 0.5
    %v610 = vmul.f32 %v541, 0.5
    %v611 = vmul.f32 %v543, 0.5
    %v612 = vmul.f32 %v594, 0.5
    %v613 = vmul.f32 %v596, 0.5
    %v614 = vmul.f32 %v527, 0.70710677
    %v615 = vmul.f32 %v529, 0.70710677
    %v616 = vmul.f32 %v580, 0.70710677
    %v617 = vmul.f32 %v582, 0.70710677
    %v618 = vmul.f32 %v531, 0.70710677
    %v619 = vmul.f32 %v533, 0.70710677
    %v620 = vmul.f32 %v584, 0.70710677
    %v621 = vmul.f32 %v586, 0.70710677
    %v622 = vmul.f32 %v537, 0.70710677
    %v623 = vmul.f32 %v539, 0.70710677
    %v624 = vmul.f32 %v590, 0.70710677
    %v625 = vmul.f32 %v592, 0.70710677
    %v626 = vmul.f32 %v541, 0.70710677
    %v627 = vmul.f32 %v543, 0.70710677
    %v628 = vmul.f32 %v594, 0.70710677
    %v629 = vmul.f32 %v596, 0.70710677
    %v630 = verf.f32.pop %v614
    %v631 = verf.f32.pop %v615
    %v632 = verf.f32.pop %v616
    %v633 = verf.f32.pop %v617
    %v634 = verf.f32.pop %v618
    %v635 = verf.f32.pop %v619
    %v636 = verf.f32.pop %v620
    %v637 = verf.f32.pop %v621
    %v638 = verf.f32.pop %v622
    %v639 = verf.f32.pop %v623
    %v640 = verf.f32.pop %v624
    %v641 = verf.f32.pop %v625
    %v642 = verf.f32.pop %v626
    %v643 = verf.f32.pop %v627
    %v644 = verf.f32.pop %v628
    %v645 = verf.f32.pop %v629
    %v646 = vadd.f32 %v630, 1.0
    %v647 = vadd.f32 %v631, 1.0
    %v648 = vadd.f32 %v632, 1.0
    %v649 = vadd.f32 %v633, 1.0
    %v650 = vadd.f32 %v634, 1.0
    %v651 = vadd.f32 %v635, 1.0
    %v652 = vadd.f32 %v636, 1.0
    %v653 = vadd.f32 %v637, 1.0
    %v654 = vadd.f32 %v638, 1.0
    %v655 = vadd.f32 %v639, 1.0
    %v656 = vadd.f32 %v640, 1.0
    %v657 = vadd.f32 %v641, 1.0
    %v658 = vadd.f32 %v642, 1.0
    %v659 = vadd.f32 %v643, 1.0
    %v660 = vadd.f32 %v644, 1.0
    %v661 = vadd.f32 %v645, 1.0
    %v662 = vmul.f32 %v598, %v646
    %v663 = vmul.f32 %v599, %v647
    %v664 = vmul.f32 %v600, %v648
    %v665 = vmul.f32 %v601, %v649
    %v666 = vmul.f32 %v602, %v650
    %v667 = vmul.f32 %v603, %v651
    %v668 = vmul.f32 %v604, %v652
    %v669 = vmul.f32 %v605, %v653
    %v670 = vmul.f32 %v606, %v654
    %v671 = vmul.f32 %v607, %v655
    %v672 = vmul.f32 %v608, %v656
    %v673 = vmul.f32 %v609, %v657
    %v674 = vmul.f32 %v610, %v658
    %v675 = vmul.f32 %v611, %v659
    %v676 = vmul.f32 %v612, %v660
    %v677 = vmul.f32 %v613, %v661
    %v678 = vpack.c.bf16 %v666, %v662
    %v679 = vpack.c.bf16 %v667, %v663
    %v680 = vpack.c.bf16 %v668, %v664
    %v681 = vpack.c.bf16 %v669, %v665
    %v682 = vpack.c.bf16 %v674, %v670
    %v683 = vpack.c.bf16 %v675, %v671
    %v684 = vpack.c.bf16 %v676, %v672
    %v685 = vpack.c.bf16 %v677, %v673
    %v686 = vld [vmem:[#allocation8] sm:$0xff]
    %v687 = vld [vmem:[#allocation8 + $0x8] sm:$0xff]
    %v688 = vld [vmem:[#allocation8 + $0x10] sm:$0xff]
    %v689 = vld [vmem:[#allocation8 + $0x18] sm:$0xff]
    %v690 = vld [vmem:[#allocation8 + $0x20] sm:$0xff]
    %v691 = vld [vmem:[#allocation8 + $0x28] sm:$0xff]
    %v692 = vld [vmem:[#allocation8 + $0x30] sm:$0xff]
    %v693 = vld [vmem:[#allocation8 + $0x38] sm:$0xff]
    %v694 = vld [vmem:[#allocation8 + $0x40] sm:$0xff]
    %v695 = vld [vmem:[#allocation8 + $0x48] sm:$0xff]
    %v696 = vld [vmem:[#allocation8 + $0x50] sm:$0xff]
    %v697 = vld [vmem:[#allocation8 + $0x58] sm:$0xff]
    %v698 = vld [vmem:[#allocation8 + $0x60] sm:$0xff]
    %v699 = vld [vmem:[#allocation8 + $0x68] sm:$0xff]
    %v700 = vld [vmem:[#allocation8 + $0x70] sm:$0xff]
    %v701 = vld [vmem:[#allocation8 + $0x78] sm:$0xff]
    %v702 = vld [vmem:[#allocation8 + $0x80] sm:$0xff]
    %v703 = vld [vmem:[#allocation8 + $0x88] sm:$0xff]
    %v704 = vld [vmem:[#allocation8 + $0x90] sm:$0xff]
    %v705 = vld [vmem:[#allocation8 + $0x98] sm:$0xff]
    %v706 = vld [vmem:[#allocation8 + $0xa0] sm:$0xff]
    %v707 = vld [vmem:[#allocation8 + $0xa8] sm:$0xff]
    %v708 = vld [vmem:[#allocation8 + $0xb0] sm:$0xff]
    %v709 = vld [vmem:[#allocation8 + $0xb8] sm:$0xff]
    %v710 = vld [vmem:[#allocation8 + $0xc0] sm:$0xff]
    %v711 = vld [vmem:[#allocation8 + $0xc8] sm:$0xff]
    %v712 = vld [vmem:[#allocation8 + $0xd0] sm:$0xff]
    %v713 = vld [vmem:[#allocation8 + $0xd8] sm:$0xff]
    %v714 = vld [vmem:[#allocation8 + $0xe0] sm:$0xff]
    %v715 = vld [vmem:[#allocation8 + $0xe8] sm:$0xff]
    %v716 = vld [vmem:[#allocation8 + $0xf0] sm:$0xff]
    %v717 = vld [vmem:[#allocation8 + $0xf8] sm:$0xff]
    %v718 = vld [vmem:[#allocation8 + $0x100] sm:$0xff]
    %v719 = vld [vmem:[#allocation8 + $0x108] sm:$0xff]
    %v720 = vld [vmem:[#allocation8 + $0x110] sm:$0xff]
    %v721 = vld [vmem:[#allocation8 + $0x118] sm:$0xff]
    %v722 = vld [vmem:[#allocation8 + $0x120] sm:$0xff]
    %v723 = vld [vmem:[#allocation8 + $0x128] sm:$0xff]
    %v724 = vld [vmem:[#allocation8 + $0x130] sm:$0xff]
    %v725 = vld [vmem:[#allocation8 + $0x138] sm:$0xff]
    %v726 = vld [vmem:[#allocation8 + $0x140] sm:$0xff]
    %v727 = vld [vmem:[#allocation8 + $0x148] sm:$0xff]
    %v728 = vld [vmem:[#allocation8 + $0x150] sm:$0xff]
    %v729 = vld [vmem:[#allocation8 + $0x158] sm:$0xff]
    %v730 = vld [vmem:[#allocation8 + $0x160] sm:$0xff]
    %v731 = vld [vmem:[#allocation8 + $0x168] sm:$0xff]
    %v732 = vld [vmem:[#allocation8 + $0x170] sm:$0xff]
    %v733 = vld [vmem:[#allocation8 + $0x178] sm:$0xff]
    %v734 = vld [vmem:[#allocation8 + $0x180] sm:$0xff]
    %v735 = vld [vmem:[#allocation8 + $0x188] sm:$0xff]
    %v736 = vld [vmem:[#allocation8 + $0x190] sm:$0xff]
    %v737 = vld [vmem:[#allocation8 + $0x198] sm:$0xff]
    %v738 = vld [vmem:[#allocation8 + $0x1a0] sm:$0xff]
    %v739 = vld [vmem:[#allocation8 + $0x1a8] sm:$0xff]
    %v740 = vld [vmem:[#allocation8 + $0x1b0] sm:$0xff]
    %v741 = vld [vmem:[#allocation8 + $0x1b8] sm:$0xff]
    %v742 = vld [vmem:[#allocation8 + $0x1c0] sm:$0xff]
    %v743 = vld [vmem:[#allocation8 + $0x1c8] sm:$0xff]
    %v744 = vld [vmem:[#allocation8 + $0x1d0] sm:$0xff]
    %v745 = vld [vmem:[#allocation8 + $0x1d8] sm:$0xff]
    %v746 = vld [vmem:[#allocation8 + $0x1e0] sm:$0xff]
    %v747 = vld [vmem:[#allocation8 + $0x1e8] sm:$0xff]
    %v748 = vld [vmem:[#allocation8 + $0x1f0] sm:$0xff]
    %v749 = vld [vmem:[#allocation8 + $0x1f8] sm:$0xff]
    %v750 = vld [vmem:[%s4] sm:$0x3]
    %v752 = vlaneseq
    %v753 = vshrl.u32 %v752, 7
    %v754 = vsub.s32 0, %v753
    %v755 = vrot.slane %v750, %v754
    %v756 = vlaneseq
    %v757 = vshrl.u32 %v756, 7
    %v758 = vsub.s32 1, %v757
    %v759 = vrot.slane %v750, %v758
    %v826 = vunpack.c.l.b16 %v686
    %v827 = vunpack.c.h.b16 %v686
    %v828 = vunpack.c.l.b16 %v687
    %v829 = vunpack.c.h.b16 %v687
    %v830 = vunpack.c.l.b16 %v688
    %v831 = vunpack.c.h.b16 %v688
    %v832 = vunpack.c.l.b16 %v689
    %v833 = vunpack.c.h.b16 %v689
    %v834 = vunpack.c.l.b16 %v690
    %v835 = vunpack.c.h.b16 %v690
    %v836 = vunpack.c.l.b16 %v691
    %v837 = vunpack.c.h.b16 %v691
    %v838 = vunpack.c.l.b16 %v692
    %v839 = vunpack.c.h.b16 %v692
    %v840 = vunpack.c.l.b16 %v693
    %v841 = vunpack.c.h.b16 %v693
    %v842 = vunpack.c.l.b16 %v694
    %v843 = vunpack.c.h.b16 %v694
    %v844 = vunpack.c.l.b16 %v695
    %v845 = vunpack.c.h.b16 %v695
    %v846 = vunpack.c.l.b16 %v696
    %v847 = vunpack.c.h.b16 %v696
    %v848 = vunpack.c.l.b16 %v697
    %v849 = vunpack.c.h.b16 %v697
    %v850 = vunpack.c.l.b16 %v698
    %v851 = vunpack.c.h.b16 %v698
    %v852 = vunpack.c.l.b16 %v699
    %v853 = vunpack.c.h.b16 %v699
    %v854 = vunpack.c.l.b16 %v700
    %v855 = vunpack.c.h.b16 %v700
    %v856 = vunpack.c.l.b16 %v701
    %v857 = vunpack.c.h.b16 %v701
    %v858 = vunpack.c.l.b16 %v702
    %v859 = vunpack.c.h.b16 %v702
    %v860 = vunpack.c.l.b16 %v703
    %v861 = vunpack.c.h.b16 %v703
    %v862 = vunpack.c.l.b16 %v704
    %v863 = vunpack.c.h.b16 %v704
    %v864 = vunpack.c.l.b16 %v705
    %v865 = vunpack.c.h.b16 %v705
    %v866 = vunpack.c.l.b16 %v706
    %v867 = vunpack.c.h.b16 %v706
    %v868 = vunpack.c.l.b16 %v707
    %v869 = vunpack.c.h.b16 %v707
    %v870 = vunpack.c.l.b16 %v708
    %v871 = vunpack.c.h.b16 %v708
    %v872 = vunpack.c.l.b16 %v709
    %v873 = vunpack.c.h.b16 %v709
    %v874 = vunpack.c.l.b16 %v710
    %v875 = vunpack.c.h.b16 %v710
    %v876 = vunpack.c.l.b16 %v711
    %v877 = vunpack.c.h.b16 %v711
    %v878 = vunpack.c.l.b16 %v712
    %v879 = vunpack.c.h.b16 %v712
    %v880 = vunpack.c.l.b16 %v713
    %v881 = vunpack.c.h.b16 %v713
    %v882 = vunpack.c.l.b16 %v714
    %v883 = vunpack.c.h.b16 %v714
    %v884 = vunpack.c.l.b16 %v715
    %v885 = vunpack.c.h.b16 %v715
    %v886 = vunpack.c.l.b16 %v716
    %v887 = vunpack.c.h.b16 %v716
    %v888 = vunpack.c.l.b16 %v717
    %v889 = vunpack.c.h.b16 %v717
    %v890 = vunpack.c.l.b16 %v718
    %v891 = vunpack.c.h.b16 %v718
    %v892 = vunpack.c.l.b16 %v719
    %v893 = vunpack.c.h.b16 %v719
    %v894 = vunpack.c.l.b16 %v720
    %v895 = vunpack.c.h.b16 %v720
    %v896 = vunpack.c.l.b16 %v721
    %v897 = vunpack.c.h.b16 %v721
    %v898 = vunpack.c.l.b16 %v722
    %v899 = vunpack.c.h.b16 %v722
    %v900 = vunpack.c.l.b16 %v723
    %v901 = vunpack.c.h.b16 %v723
    %v902 = vunpack.c.l.b16 %v724
    %v903 = vunpack.c.h.b16 %v724
    %v904 = vunpack.c.l.b16 %v725
    %v905 = vunpack.c.h.b16 %v725
    %v906 = vunpack.c.l.b16 %v726
    %v907 = vunpack.c.h.b16 %v726
    %v908 = vunpack.c.l.b16 %v727
    %v909 = vunpack.c.h.b16 %v727
    %v910 = vunpack.c.l.b16 %v728
    %v911 = vunpack.c.h.b16 %v728
    %v912 = vunpack.c.l.b16 %v729
    %v913 = vunpack.c.h.b16 %v729
    %v914 = vunpack.c.l.b16 %v730
    %v915 = vunpack.c.h.b16 %v730
    %v916 = vunpack.c.l.b16 %v731
    %v917 = vunpack.c.h.b16 %v731
    %v918 = vunpack.c.l.b16 %v732
    %v919 = vunpack.c.h.b16 %v732
    %v920 = vunpack.c.l.b16 %v733
    %v921 = vunpack.c.h.b16 %v733
    %v922 = vunpack.c.l.b16 %v734
    %v923 = vunpack.c.h.b16 %v734
    %v924 = vunpack.c.l.b16 %v735
    %v925 = vunpack.c.h.b16 %v735
    %v926 = vunpack.c.l.b16 %v736
    %v927 = vunpack.c.h.b16 %v736
    %v928 = vunpack.c.l.b16 %v737
    %v929 = vunpack.c.h.b16 %v737
    %v930 = vunpack.c.l.b16 %v738
    %v931 = vunpack.c.h.b16 %v738
    %v932 = vunpack.c.l.b16 %v739
    %v933 = vunpack.c.h.b16 %v739
    %v934 = vunpack.c.l.b16 %v740
    %v935 = vunpack.c.h.b16 %v740
    %v936 = vunpack.c.l.b16 %v741
    %v937 = vunpack.c.h.b16 %v741
    %v938 = vunpack.c.l.b16 %v742
    %v939 = vunpack.c.h.b16 %v742
    %v940 = vunpack.c.l.b16 %v743
    %v941 = vunpack.c.h.b16 %v743
    %v942 = vunpack.c.l.b16 %v744
    %v943 = vunpack.c.h.b16 %v744
    %v944 = vunpack.c.l.b16 %v745
    %v945 = vunpack.c.h.b16 %v745
    %v946 = vunpack.c.l.b16 %v746
    %v947 = vunpack.c.h.b16 %v746
    %v948 = vunpack.c.l.b16 %v747
    %v949 = vunpack.c.h.b16 %v747
    %v950 = vunpack.c.l.b16 %v748
    %v951 = vunpack.c.h.b16 %v748
    %v952 = vunpack.c.l.b16 %v749
    %v953 = vunpack.c.h.b16 %v749
    %v954 = vpack.c.b16 %v828, %v826
    %v955 = vpack.c.b16 %v829, %v827
    %v956 = vpack.c.b16 %v832, %v830
    %v957 = vpack.c.b16 %v833, %v831
    %v958 = vpack.c.b16 %v836, %v834
    %v959 = vpack.c.b16 %v837, %v835
    %v960 = vpack.c.b16 %v840, %v838
    %v961 = vpack.c.b16 %v841, %v839
    %v962 = vpack.c.b16 %v844, %v842
    %v963 = vpack.c.b16 %v845, %v843
    %v964 = vpack.c.b16 %v848, %v846
    %v965 = vpack.c.b16 %v849, %v847
    %v966 = vpack.c.b16 %v852, %v850
    %v967 = vpack.c.b16 %v853, %v851
    %v968 = vpack.c.b16 %v856, %v854
    %v969 = vpack.c.b16 %v857, %v855
    %v970 = vpack.c.b16 %v860, %v858
    %v971 = vpack.c.b16 %v861, %v859
    %v972 = vpack.c.b16 %v864, %v862
    %v973 = vpack.c.b16 %v865, %v863
    %v974 = vpack.c.b16 %v868, %v866
    %v975 = vpack.c.b16 %v869, %v867
    %v976 = vpack.c.b16 %v872, %v870
    %v977 = vpack.c.b16 %v873, %v871
    %v978 = vpack.c.b16 %v876, %v874
    %v979 = vpack.c.b16 %v877, %v875
    %v980 = vpack.c.b16 %v880, %v878
    %v981 = vpack.c.b16 %v881, %v879
    %v982 = vpack.c.b16 %v884, %v882
    %v983 = vpack.c.b16 %v885, %v883
    %v984 = vpack.c.b16 %v888, %v886
    %v985 = vpack.c.b16 %v889, %v887
    %v986 = vpack.c.b16 %v892, %v890
    %v987 = vpack.c.b16 %v893, %v891
    %v988 = vpack.c.b16 %v896, %v894
    %v989 = vpack.c.b16 %v897, %v895
    %v990 = vpack.c.b16 %v900, %v898
    %v991 = vpack.c.b16 %v901, %v899
    %v992 = vpack.c.b16 %v904, %v902
    %v993 = vpack.c.b16 %v905, %v903
    %v994 = vpack.c.b16 %v908, %v906
    %v995 = vpack.c.b16 %v909, %v907
    %v996 = vpack.c.b16 %v912, %v910
    %v997 = vpack.c.b16 %v913, %v911
    %v998 = vpack.c.b16 %v916, %v914
    %v999 = vpack.c.b16 %v917, %v915
    %v1000 = vpack.c.b16 %v920, %v918
    %v1001 = vpack.c.b16 %v921, %v919
    %v1002 = vpack.c.b16 %v924, %v922
    %v1003 = vpack.c.b16 %v925, %v923
    %v1004 = vpack.c.b16 %v928, %v926
    %v1005 = vpack.c.b16 %v929, %v927
    %v1006 = vpack.c.b16 %v932, %v930
    %v1007 = vpack.c.b16 %v933, %v931
    %v1008 = vpack.c.b16 %v936, %v934
    %v1009 = vpack.c.b16 %v937, %v935
    %v1010 = vpack.c.b16 %v940, %v938
    %v1011 = vpack.c.b16 %v941, %v939
    %v1012 = vpack.c.b16 %v944, %v942
    %v1013 = vpack.c.b16 %v945, %v943
    %v1014 = vpack.c.b16 %v948, %v946
    %v1015 = vpack.c.b16 %v949, %v947
    %v1016 = vpack.c.b16 %v952, %v950
    %v1017 = vpack.c.b16 %v953, %v951
    %1082 = vmatprep.subr.bf16.mxu0 %v969
    %1083 = vmatpush1.bf16.msra.mxu0 %v968
    %1084 = vmatprep.subr.bf16.mxu0 %v967
    %1085 = vmatpush1.bf16.msra.mxu0 %v966
    %1086 = vmatprep.subr.bf16.mxu0 %v965
    %1087 = vmatpush1.bf16.msra.mxu0 %v964
    %1088 = vmatprep.subr.bf16.mxu0 %v963
    %1089 = vmatpush1.bf16.msra.mxu0 %v962
    %1090 = vmatprep.subr.bf16.mxu0 %v961
    %1091 = vmatpush1.bf16.msra.mxu0 %v960
    %1092 = vmatprep.subr.bf16.mxu0 %v959
    %1093 = vmatpush1.bf16.msra.mxu0 %v958
    %1094 = vmatprep.subr.bf16.mxu0 %v957
    %1095 = vmatpush1.bf16.msra.mxu0 %v956
    %1096 = vmatprep.subr.bf16.mxu0 %v955
    %1097 = vmatpush1.bf16.msra.mxu0 %v954
    %1098 = vmatprep.subr.bf16.mxu0 %v985
    %1099 = vmatpush2.bf16.msra.mxu0 %v984
    %1100 = vmatprep.subr.bf16.mxu0 %v983
    %1101 = vmatpush2.bf16.msra.mxu0 %v982
    %1102 = vmatprep.subr.bf16.mxu0 %v981
    %1103 = vmatpush2.bf16.msra.mxu0 %v980
    %1104 = vmatprep.subr.bf16.mxu0 %v979
    %1105 = vmatpush2.bf16.msra.mxu0 %v978
    %1106 = vmatprep.subr.bf16.mxu0 %v977
    %1107 = vmatpush2.bf16.msra.mxu0 %v976
    %1108 = vmatprep.subr.bf16.mxu0 %v975
    %1109 = vmatpush2.bf16.msra.mxu0 %v974
    %1110 = vmatprep.subr.bf16.mxu0 %v973
    %1111 = vmatpush2.bf16.msra.mxu0 %v972
    %1112 = vmatprep.subr.bf16.mxu0 %v971
    %1113 = vmatpush2.bf16.msra.mxu0 %v970
    %1114 = vmatprep.mubr.bf16.mxu0 %v679
    %1115 = vmatmul.mubr.bf16.gmra.mxu0 %v678
    %v1116 = vpop.f32.mrf.mxu0
    %v1117 = vadd.f32 %v755, %v1116
    %v1118 = vpop.f32.mrf.mxu0
    %v1119 = vadd.f32 %v759, %v1118
    %v1120 = vpop.f32.mrf.mxu0
    %v1121 = vadd.f32 %v755, %v1120
    %v1122 = vpop.f32.mrf.mxu0
    %v1123 = vadd.f32 %v759, %v1122
    %1124 = vmatprep.mubr.bf16.mxu0 %v683
    %1125 = vmatmul.mubr.bf16.gmra.mxu0 %v682
    %v1126 = vpop.f32.mrf.mxu0
    %v1127 = vadd.f32 %v755, %v1126
    %v1128 = vpop.f32.mrf.mxu0
    %v1129 = vadd.f32 %v759, %v1128
    %v1130 = vpop.f32.mrf.mxu0
    %v1131 = vadd.f32 %v755, %v1130
    %v1132 = vpop.f32.mrf.mxu0
    %v1133 = vadd.f32 %v759, %v1132
    %1134 = vdwg.mxu0
    %1135 = vmatprep.subr.bf16.mxu0 %v1001
    %1136 = vmatpush1.bf16.msra.mxu0 %v1000
    %1137 = vmatprep.subr.bf16.mxu0 %v999
    %1138 = vmatpush1.bf16.msra.mxu0 %v998
    %1139 = vmatprep.subr.bf16.mxu0 %v997
    %1140 = vmatpush1.bf16.msra.mxu0 %v996
    %1141 = vmatprep.subr.bf16.mxu0 %v995
    %1142 = vmatpush1.bf16.msra.mxu0 %v994
    %1143 = vmatprep.subr.bf16.mxu0 %v993
    %1144 = vmatpush1.bf16.msra.mxu0 %v992
    %1145 = vmatprep.subr.bf16.mxu0 %v991
    %1146 = vmatpush1.bf16.msra.mxu0 %v990
    %1147 = vmatprep.subr.bf16.mxu0 %v989
    %1148 = vmatpush1.bf16.msra.mxu0 %v988
    %1149 = vmatprep.subr.bf16.mxu0 %v987
    %1150 = vmatpush1.bf16.msra.mxu0 %v986
    %1151 = vmatprep.subr.bf16.mxu0 %v1017
    %1152 = vmatpush2.bf16.msra.mxu0 %v1016
    %1153 = vmatprep.subr.bf16.mxu0 %v1015
    %1154 = vmatpush2.bf16.msra.mxu0 %v1014
    %1155 = vmatprep.subr.bf16.mxu0 %v1013
    %1156 = vmatpush2.bf16.msra.mxu0 %v1012
    %1157 = vmatprep.subr.bf16.mxu0 %v1011
    %1158 = vmatpush2.bf16.msra.mxu0 %v1010
    %1159 = vmatprep.subr.bf16.mxu0 %v1009
    %1160 = vmatpush2.bf16.msra.mxu0 %v1008
    %1161 = vmatprep.subr.bf16.mxu0 %v1007
    %1162 = vmatpush2.bf16.msra.mxu0 %v1006
    %1163 = vmatprep.subr.bf16.mxu0 %v1005
    %1164 = vmatpush2.bf16.msra.mxu0 %v1004
    %1165 = vmatprep.subr.bf16.mxu0 %v1003
    %1166 = vmatpush2.bf16.msra.mxu0 %v1002
    %1167 = vmatprep.mubr.bf16.mxu0 %v681
    %1168 = vmatmul.mubr.bf16.gmra.mxu0 %v680
    %v1169 = vpop.f32.mrf.mxu0
    %v1170 = vadd.f32 %v1117, %v1169
    %v1171 = vpop.f32.mrf.mxu0
    %v1172 = vadd.f32 %v1119, %v1171
    %v1173 = vpop.f32.mrf.mxu0
    %v1174 = vadd.f32 %v1121, %v1173
    %v1175 = vpop.f32.mrf.mxu0
    %v1176 = vadd.f32 %v1123, %v1175
    %1177 = vmatprep.mubr.bf16.mxu0 %v685
    %1178 = vmatmul.mubr.bf16.gmra.mxu0 %v684
    %v1179 = vpop.f32.mrf.mxu0
    %v1180 = vadd.f32 %v1127, %v1179
    %v1181 = vpop.f32.mrf.mxu0
    %v1182 = vadd.f32 %v1129, %v1181
    %v1183 = vpop.f32.mrf.mxu0
    %v1184 = vadd.f32 %v1131, %v1183
    %v1185 = vpop.f32.mrf.mxu0
    %v1186 = vadd.f32 %v1133, %v1185
    %1187 = vdwg.mxu0
    %v1188 = vpack.c.bf16 %v1174, %v1170
    %v1189 = vpack.c.bf16 %v1176, %v1172
    %v1190 = vpack.c.bf16 %v1184, %v1180
    %v1191 = vpack.c.bf16 %v1186, %v1182
    %v1196 = vunpack.c.l.b16 %v1188
    %v1197 = vunpack.c.l.b16 %v1189
    %v1198 = vunpack.c.h.b16 %v1188
    %v1199 = vunpack.c.h.b16 %v1189
    %v1200 = vunpack.c.l.b16 %v1190
    %v1201 = vunpack.c.l.b16 %v1191
    %v1202 = vunpack.c.h.b16 %v1190
    %v1203 = vunpack.c.h.b16 %v1191
    %v1204 = vpack.c.b16 %v1197, %v1196
    %v1205 = vpack.c.b16 %v1199, %v1198
    %v1206 = vpack.c.b16 %v1201, %v1200
    %v1207 = vpack.c.b16 %v1203, %v1202
    %1212 = vst [vmem:[#allocation10] sm:$0xff] %v1204
    %1213 = vst [vmem:[#allocation10 + $0x8] sm:$0xff] %v1205
    %1214 = vst [vmem:[#allocation10 + $0x10] sm:$0xff] %v1206
    %1215 = vst [vmem:[#allocation10 + $0x18] sm:$0xff] %v1207
    // Predicated region
    $region38: #{tpu_custom_call.1} parent=1 // pred_check
      _
    $region39: #{tpu_custom_call.1} parent=1 // pred_check_branch
      %1217 = sbr.rel (0) target = $region41
    $region40: #{tpu_custom_call.1} parent=1 // pred_region
      %s1219 = ssub.s32 512, 512
      %1220 = vsyncadd [#allocation4], %s1219
      %s1221 = sshll.u32 [#allocation10], 4
      %s1222 = int_to_ptr.vmem [resolvable:$true] %s1221
      %1227 = dma.vmem_to_hbm [thread:$0]  %s1222, 512, %s5, [#allocation4], 128, 128, 8
    $region41: #{tpu_custom_call.1} parent=1 // pred_fallthru
      _
    // Predicated region
    $region42: #{tpu_custom_call.1} parent=1 // pred_check
      _
    $region43: #{tpu_custom_call.1} parent=1 // pred_check_branch
      %1229 = sbr.rel (0) target = $region45
    $region44: #{tpu_custom_call.1} parent=1 // pred_region
      %1230 = dma.done [#allocation4], 512
    $region45: #{tpu_custom_call.1} parent=1 // pred_fallthru
      _
    %1231 = vsyncpa [#allocation3], 1
    %1232 = vsyncpa [#allocation6], 1
    %1233 = vsyncpa [#allocation9], 1
    %1234 = vsyncpa [#allocation4], 1

</llo_original>
